<compile_context>
chip_gen: v6e
topology: v6e:2x2x1
jax: 0.10.0
libtpu: 0.0.40
codegen_flags: <defaults>
</compile_context>

<pallas_src>
import functools
import math

import jax
import jax.numpy as jnp
from jax import lax
from jax.experimental import pallas as pl
from jax.experimental.pallas import tpu as pltpu


_LANE = 128
_SUBLANE = 8
_VCHUNK = 256           # vocab chunk size for the one-hot MXU path
_ONEHOT_MAX_VOCAB = 1024
_GATHER_SLOTS = 8       # row DMAs kept in flight per grid step


def _round_up(x, m):
    return ((x + m - 1) // m) * m


def _vmem_capacity_bytes():
    """Generation-aware VMEM size (v5e/v6e: 128 MiB, v7x: 64 MiB)."""
    try:
        cap = getattr(pltpu.get_tpu_info(), "vmem_capacity_bytes", None)
        if cap:
            return int(cap)
    except Exception:
        pass
    return 64 << 20     # conservative fallback, safe on every generation


def _pick_tile_tokens(requested, num_tokens, per_token_bytes, vmem_cap, granule):
    """Token-tile size: big enough to amortize ~0.35us/grid-step, small enough
    to fit the VMEM budget and to leave >= 2 grid steps for v7x megacore."""
    tokens8 = _round_up(max(num_tokens, 1), _SUBLANE)
    if requested is None:
        budget = max(vmem_cap // 8, 2 << 20)
        t = min(budget // max(per_token_bytes, 1), 2048)
        if num_tokens >= 2 * granule:
            # Keep at least two grid steps so the second TensorCore on v7x
            # gets a share (dimension_semantics=("parallel",)).
            t = min(t, _round_up(pl.cdiv(tokens8, 2), granule))
    else:
        t = int(requested)
    t = min(t, tokens8)
    g = granule if t >= granule else _SUBLANE
    return max(_SUBLANE, (t // g) * g)


def _onehot_embed_kernel(ids_ref, table_ref, o_ref, *, scale):
    """Tiny-vocab gather as (one-hot @ table) on the MXU.

    ids_ref:   (T, 1)  int32 token ids for this tile
    table_ref: (V, Dp) lookup table (VMEM resident across grid steps)
    o_ref:     (T, Dp) output tile
    """
    ids = ids_ref[...]                              # (T, 1)
    t = ids.shape[0]
    v, dp = table_ref.shape
    acc = jnp.zeros((t, dp), jnp.float32)
    # Build the one-hot in vocab chunks so the (T, V) mask never has to be
    # materialized / spilled; each chunk stays in vregs.
    for v0 in range(0, v, _VCHUNK):
        vc = min(_VCHUNK, v - v0)
        sel = (lax.broadcasted_iota(jnp.int32, (t, vc), 1) + v0) == ids
        acc = acc + jnp.dot(sel.astype(table_ref.dtype),
                            table_ref[v0:v0 + vc, :],
                            preferred_element_type=jnp.float32)
    if scale is not None:
        acc = acc * jnp.float32(scale)
    o_ref[...] = acc.astype(o_ref.dtype)


def _dma_gather_kernel(ids_ref, table_ref, o_ref, rows_ref, sem,
                       *, scale, tile_tokens, nslots):
    """General row gather: per-token DMA of one HBM table row into a VMEM tile,
    `nslots` copies kept in flight, then one fused lane-dense scale/store.

    ids_ref:   (padded_tokens,) int32 in SMEM (scalar-prefetched)
    table_ref: (V, Dp) lookup table left in HBM (memory_space=pl.ANY)
    o_ref:     (tile_tokens, Dp) output tile (VMEM)
    rows_ref:  (tile_tokens, Dp) VMEM landing buffer for the row DMAs
    sem:       (nslots,) DMA semaphores
    """
    base = pl.program_id(0) * tile_tokens

    def row_copy(tok, slot):
        return pltpu.make_async_copy(
            table_ref.at[pl.ds(ids_ref[base + tok], 1), :],
            rows_ref.at[pl.ds(tok, 1), :],
            sem.at[slot])

    # Prime the pipeline with the first `nslots` row DMAs.
    for s in range(nslots):
        row_copy(s, s).start()

    def body(i, carry):
        slot = i % nslots
        # Wait for token i's DMA (same transfer size; indices here are dummies).
        pltpu.make_async_copy(table_ref.at[pl.ds(0, 1), :],
                              rows_ref.at[pl.ds(0, 1), :],
                              sem.at[slot]).wait()
        nxt = i + nslots

        @pl.when(nxt < tile_tokens)
        def _():
            row_copy(nxt, slot).start()

        return carry

    lax.fori_loop(0, tile_tokens, body, 0)

    rows = rows_ref[...]
    if scale is not None:
        rows = (rows.astype(jnp.float32) * jnp.float32(scale)).astype(o_ref.dtype)
    o_ref[...] = rows


def embedding_forward(inputs, lookup_table, *, scale=True, tile_tokens=None,
                      method=None):
    """Pallas embedding lookup: lookup_table[inputs] (* sqrt(num_units)).

    inputs:       integer array of arbitrary shape (token ids, assumed in range)
    lookup_table: (vocab_size, num_units)
    method:       None (auto) | "gather" (HBM DMA row gather, any vocab/dtype)
                  | "onehot" (MXU path, tiny vocab only)
    """
    # TODO(synk): out-of-range / negative ids are not validated (the one-hot
    # path silently yields zeros, the gather path would fetch an arbitrary
    # row); callers must guarantee 0 <= id < vocab_size as PyTorch does.
    vocab, num_units = lookup_table.shape
    lead_shape = inputs.shape
    num_tokens = int(math.prod(lead_shape)) if lead_shape else 1
    scale_val = float(num_units) ** 0.5 if scale else None

    vmem_cap = _vmem_capacity_bytes()
    itemsize = lookup_table.dtype.itemsize

    # Pad the feature dim to a lane multiple once, so every output store is an
    # unmasked full-lane vst; the pad columns are sliced off at the end.
    dp = _round_up(num_units, _LANE)
    table_p = lookup_table
    if dp != num_units:
        table_p = jnp.pad(lookup_table, ((0, 0), (0, dp - num_units)))

    table_bytes = vocab * dp * itemsize
    if method is None:
        # The MXU one-hot only pays off for tiny vocabularies; f32 (and any
        # non-bf16) tables go to the DMA gather, which is exact and avoids the
        # multi-pass f32 MXU decomposition / v7x's bf16-only MXU.
        use_onehot = (vocab <= _ONEHOT_MAX_VOCAB
                      and lookup_table.dtype == jnp.bfloat16
                      and 2 * table_bytes <= vmem_cap // 8)
        method = "onehot" if use_onehot else "gather"

    ids = inputs.reshape(num_tokens).astype(jnp.int32)

    if method == "onehot":
        per_token = 2 * dp * itemsize + 4 * _VCHUNK + 4 * dp + 8
        tile = _pick_tile_tokens(tile_tokens, num_tokens, per_token, vmem_cap,
                                 granule=256)   # fill the 256-wide MXU M-tile
        padded = _round_up(num_tokens, tile)
        if padded != num_tokens:
            ids = jnp.pad(ids, (0, padded - num_tokens))   # id 0 is always valid
        est = (2 * table_bytes + 2 * tile * dp * itemsize
               + tile * (4 * _VCHUNK + 4 * dp) + (2 << 20))
        vmem_limit = int(min(max(32 << 20, 2 * est), (vmem_cap * 3) // 4))

        out = pl.pallas_call(
            functools.partial(_onehot_embed_kernel, scale=scale_val),
            out_shape=jax.ShapeDtypeStruct((padded, dp), lookup_table.dtype),
            grid_spec=pltpu.PrefetchScalarGridSpec(
                num_scalar_prefetch=0,
                grid=(padded // tile,),
                in_specs=[
                    pl.BlockSpec((tile, 1), lambda i: (i, 0)),
                    # Whole (tiny) table: constant block index -> DMA'd once,
                    # re-used across all grid steps.
                    pl.BlockSpec((vocab, dp), lambda i: (0, 0)),
                ],
                out_specs=pl.BlockSpec((tile, dp), lambda i: (i, 0)),
            ),
            compiler_params=pltpu.CompilerParams(
                dimension_semantics=("parallel",),
                vmem_limit_bytes=vmem_limit,
            ),
        )(ids.reshape(padded, 1), table_p)

    elif method == "gather":
        per_token = 3 * dp * itemsize          # 2x out (dbl-buffer) + landing buf
        tile = _pick_tile_tokens(tile_tokens, num_tokens, per_token, vmem_cap,
                                 granule=_SUBLANE)
        padded = _round_up(num_tokens, tile)
        if padded != num_tokens:
            ids = jnp.pad(ids, (0, padded - num_tokens))
        nslots = min(_GATHER_SLOTS, tile)
        est = 3 * tile * dp * itemsize + (2 << 20)
        vmem_limit = int(min(max(32 << 20, 2 * est), (vmem_cap * 3) // 4))

        out = pl.pallas_call(
            functools.partial(_dma_gather_kernel, scale=scale_val,
                              tile_tokens=tile, nslots=nslots),
            out_shape=jax.ShapeDtypeStruct((padded, dp), lookup_table.dtype),
            grid_spec=pltpu.PrefetchScalarGridSpec(
                num_scalar_prefetch=1,                       # ids -> SMEM
                grid=(padded // tile,),
                in_specs=[pl.BlockSpec(memory_space=pl.ANY)],  # table stays in HBM
                out_specs=pl.BlockSpec((tile, dp), lambda i, ids_sref: (i, 0)),
                scratch_shapes=[
                    pltpu.VMEM((tile, dp), lookup_table.dtype),
                    pltpu.SemaphoreType.DMA((nslots,)),
                ],
            ),
            compiler_params=pltpu.CompilerParams(
                dimension_semantics=("parallel",),
                vmem_limit_bytes=vmem_limit,
            ),
        )(ids, table_p)
    else:
        raise ValueError(f"unknown method: {method!r}")

    out = out[:num_tokens, :num_units]
    return out.reshape(*lead_shape, num_units)


if __name__ == "__main__":
    key = jax.random.PRNGKey(0)
    k1, k2, k3, k4 = jax.random.split(key, 4)

    # --- Case 1: tiny bf16 vocab -> MXU one-hot path -------------------------
    vocab1, units1 = 64, 128
    batch1, seq1 = 2, 8
    std1 = math.sqrt(2.0 / (vocab1 + units1))                 # xavier_normal
    tbl1 = (std1 * jax.random.normal(k1, (vocab1, units1), jnp.float32))
    tbl1 = tbl1.astype(jnp.bfloat16)
    tbl1 = tbl1.at[0, :].set(0)                                # zeros_pad=True
    ids1 = jax.random.randint(k2, (batch1, seq1), 0, vocab1, dtype=jnp.int32)

    out1 = jax.block_until_ready(embedding_forward(ids1, tbl1, scale=True))
    ref1 = (tbl1.astype(jnp.float32)[ids1] * (units1 ** 0.5)).astype(jnp.bfloat16)
    assert out1.shape == (batch1, seq1, units1), out1.shape
    assert jnp.allclose(out1.astype(jnp.float32), ref1.astype(jnp.float32),
                        atol=1e-2, rtol=1e-2), float(
        jnp.max(jnp.abs(out1.astype(jnp.float32) - ref1.astype(jnp.float32))))

    # --- Case 2: f32 table, non-128 feature dim -> DMA row-gather path -------
    vocab2, units2 = 512, 96
    batch2, seq2 = 2, 23                                       # exercises padding
    std2 = math.sqrt(2.0 / (vocab2 + units2))
    tbl2 = std2 * jax.random.normal(k3, (vocab2, units2), jnp.float32)
    tbl2 = tbl2.at[0, :].set(0.0)
    ids2 = jax.random.randint(k4, (batch2, seq2), 0, vocab2, dtype=jnp.int32)

    out2 = jax.block_until_ready(
        embedding_forward(ids2, tbl2, scale=True, tile_tokens=16))
    ref2 = tbl2[ids2] * (units2 ** 0.5)
    assert out2.shape == (batch2, seq2, units2), out2.shape
    assert jnp.allclose(out2, ref2, atol=1e-5, rtol=1e-5), float(
        jnp.max(jnp.abs(out2 - ref2)))

    print("KERNEL_OK")
</pallas_src>

<mosaic_0001>
module attributes {stable_mosaic.version = 11 : i64} {
  func.func @_onehot_embed_kernel(%arg0: i32, %arg1: memref<16x1xi32, #tpu.memory_space<vmem>>, %arg2: memref<64x128xbf16, #tpu.memory_space<vmem>>, %arg3: memref<16x128xbf16, #tpu.memory_space<vmem>>) attributes {dimension_semantics = [#tpu.dimension_semantics<parallel>], iteration_bounds = array<i64: 1>, scalar_prefetch = 0 : i64, scratch_operands = 0 : i64, tpu.core_type = #tpu.core_type<tc>, window_params = [{transform_indices = @transform_0, window_bounds = array<i64: 16, 1>}, {pipeline_mode = #tpu.pipeline_mode<synchronous>, transform_indices = @transform_1, window_bounds = array<i64: 64, 128>}, {transform_indices = @transform_2, window_bounds = array<i64: 16, 128>}]} {
    %c0 = arith.constant 0 : index
    %c0_0 = arith.constant 0 : index
    %0 = vector.load %arg1[%c0, %c0_0] : memref<16x1xi32, #tpu.memory_space<vmem>>, vector<16x1xi32>
    %cst = arith.constant 0.000000e+00 : f32
    %1 = vector.broadcast %cst : f32 to vector<16x128xf32>
    %2 = tpu.iota {dimensions = array<i32: 1>} : vector<16x64xi32>
    %c0_i32 = arith.constant 0 : i32
    %3 = vector.broadcast %c0_i32 : i32 to vector<16x64xi32>
    %4 = arith.addi %2, %3 : vector<16x64xi32>
    %5 = vector.broadcast %0 : vector<16x1xi32> to vector<16x64xi32>
    %6 = arith.cmpi eq, %4, %5 : vector<16x64xi32>
    %7 = arith.extui %6 : vector<16x64xi1> to vector<16x64xi32>
    %8 = arith.sitofp %7 : vector<16x64xi32> to vector<16x64xf32>
    %9 = arith.truncf %8 : vector<16x64xf32> to vector<16x64xbf16>
    %c0_1 = arith.constant 0 : index
    %c0_2 = arith.constant 0 : index
    %10 = vector.load %arg2[%c0_1, %c0_2] : memref<64x128xbf16, #tpu.memory_space<vmem>>, vector<64x128xbf16>
    %cst_3 = arith.constant dense<0.000000e+00> : vector<16x128xf32>
    %11 = tpu.matmul %9, %10, %cst_3 {dimension_numbers = #tpu.dot_dimension_numbers<[1], [0], [0], [1], [0, 0, 1, 1], [], []>} : vector<16x64xbf16>, vector<64x128xbf16>, vector<16x128xf32> -> vector<16x128xf32>
    %12 = arith.addf %1, %11 : vector<16x128xf32>
    %cst_4 = arith.constant 11.3137083 : f32
    %13 = vector.broadcast %cst_4 : f32 to vector<16x128xf32>
    %14 = arith.mulf %12, %13 : vector<16x128xf32>
    %15 = arith.truncf %14 : vector<16x128xf32> to vector<16x128xbf16>
    %c0_5 = arith.constant 0 : index
    %c0_6 = arith.constant 0 : index
    %16 = vector.load %arg3[%c0_5, %c0_6] : memref<16x128xbf16, #tpu.memory_space<vmem>>, vector<16x128xbf16>
    tpu.vector_store %arg3[%c0_5, %c0_6], %15 {strides = array<i32>} : memref<16x128xbf16, #tpu.memory_space<vmem>>, vector<16x128xbf16>,
    return
  }
  func.func @transform_0(%arg0: i32) -> (i32, i32) {
    %c0_i32 = arith.constant 0 : i32
    %c0_i32_0 = arith.constant 0 : i32
    return %arg0, %c0_i32 : i32, i32
  }
  func.func @transform_1(%arg0: i32) -> (i32, i32) {
    %c0_i32 = arith.constant 0 : i32
    %c0_i32_0 = arith.constant 0 : i32
    %c0_i32_1 = arith.constant 0 : i32
    return %c0_i32, %c0_i32_0 : i32, i32
  }
  func.func @transform_2(%arg0: i32) -> (i32, i32) {
    %c0_i32 = arith.constant 0 : i32
    %c0_i32_0 = arith.constant 0 : i32
    return %arg0, %c0_i32 : i32, i32
  }
}

</mosaic_0001>

<llo_original>
// kernel: tpu_custom_call.1
$region0: #{tpu_custom_call.1}
  #allocation0 [shape = 'u32[]', space=smem, size = 0x4, offset = 0x4, fixed_abs, tag = 'smem constant byte address 0x4 - core index']
  #allocation1 [shape = 'u32[144,128]{1,0:T(1,128)}', space=vmem, size = 0x12000, scoped, tag = 'internal scratch']
  %s0 = inlined_call_operand.vmem [shape: s32[16,1], index: 0, kind: input, shape index: {}]
  %s1 = inlined_call_operand.hbm [shape: bf16[64,128], index: 1, kind: input, shape index: {}]
  %s2 = inlined_call_operand.hbm [shape: bf16[16,128], index: 2, kind: output, shape index: {}]
  %s3 = sld [smem:[#allocation0]]
  $region22: #{tpu_custom_call.1} parent=0
    _
  %s5 = ssub.s32 1, %s3
  %s6 = scalar_select 0, %s5, %s3
  $region1: #{tpu_custom_call.1} parent=0
    #allocation2 [shape = 'u8[16384]{0}', space=vmem, size = 0x4000, scoped, tag = 'input window, operand 1, single buffered']
    #allocation3 [shape = 's32[1]{0}', space=sflag, size = 0x4, scoped, tag = 'scoped memory for tpu_custom_call.1']
    #allocation4 [shape = 's32[1]{0}', space=sflag, size = 0x4, scoped, tag = 'scoped memory for tpu_custom_call.1']
    #allocation5 [shape = 'u8[4096]{0}', space=vmem, size = 0x1000, scoped, tag = 'output window, operand 0, single buffered']
    %7 = vsyncpa [#allocation3], 0
    %8 = vsyncpa [#allocation4], 0
    // Predicated region
    $region2: #{tpu_custom_call.1} parent=1 // pred_check
      _
    $region3: #{tpu_custom_call.1} parent=1 // pred_check_branch
      %10 = sbr.rel (0) target = $region5
    $region4: #{tpu_custom_call.1} parent=1 // pred_region
      _
    $region5: #{tpu_custom_call.1} parent=1 // pred_fallthru
      _
    // Predicated region
    $region6: #{tpu_custom_call.1} parent=1 // pred_check
      _
    $region7: #{tpu_custom_call.1} parent=1 // pred_check_branch
      %12 = sbr.rel (0) target = $region9
    $region8: #{tpu_custom_call.1} parent=1 // pred_region
      %s14 = ssub.s32 512, 512
      %15 = vsyncadd [#allocation3], %s14
      %s16 = sshll.u32 [#allocation2], 4
      %s17 = int_to_ptr.vmem [resolvable:$true] %s16
      %22 = dma.hbm_to_vmem [thread:$0]  %s1, 512, %s17, [#allocation3], 64, 64, 4
    $region9: #{tpu_custom_call.1} parent=1 // pred_fallthru
      _
    // Predicated region
    $region10: #{tpu_custom_call.1} parent=1 // pred_check
      _
    $region11: #{tpu_custom_call.1} parent=1 // pred_check_branch
      %24 = sbr.rel (0) target = $region13
    $region12: #{tpu_custom_call.1} parent=1 // pred_region
      %25 = dma.done [#allocation3], 512
    $region13: #{tpu_custom_call.1} parent=1 // pred_fallthru
      _
    %v27 = vld [vmem:[%s0] sm:$0xff]
    %v28 = vld [vmem:[%s0 + $0x8] sm:$0xff]
    %v29 = vlaneseq
    %v30 = vand.u32 %v29, 127
    %31 = vset.pattern.permute.xlu0 0
    %32 = vperm.xlu0 %31, %v27
    %v33 = vpop.permute.xlu0 %32
    %34 = vset.pattern.permute.xlu0 0
    %35 = vperm.xlu0 %34, %v28
    %v36 = vpop.permute.xlu0 %35
    %vm37 = vcmp.eq.s32.totalorder %v30, %v33
    %vm38 = vcmp.eq.s32.totalorder %v30, %v36
    %v39 = vsel %vm37, 1, 0
    %v40 = vsel %vm38, 1, 0
    %v41 = vcvt.s32.f32 %v39
    %v42 = vcvt.s32.f32 %v40
    %v43 = vpack.c.bf16 %v42, %v41
    %v44 = vld [vmem:[#allocation2] sm:$0xf]
    %v45 = vld [vmem:[#allocation2 + $0x4] sm:$0xf]
    %v46 = vld [vmem:[#allocation2 + $0x8] sm:$0xf]
    %v47 = vld [vmem:[#allocation2 + $0xc] sm:$0xf]
    %v48 = vld [vmem:[#allocation2 + $0x10] sm:$0xf]
    %v49 = vld [vmem:[#allocation2 + $0x14] sm:$0xf]
    %v50 = vld [vmem:[#allocation2 + $0x18] sm:$0xf]
    %v51 = vld [vmem:[#allocation2 + $0x1c] sm:$0xf]
    %v60 = vunpack.c.l.b16 %v44
    %v61 = vunpack.c.l.b16 %v45
    %v62 = vunpack.c.l.b16 %v46
    %v63 = vunpack.c.l.b16 %v47
    %v64 = vunpack.c.l.b16 %v48
    %v65 = vunpack.c.l.b16 %v49
    %v66 = vunpack.c.l.b16 %v50
    %v67 = vunpack.c.l.b16 %v51
    %v68 = vpack.c.b16 %v61, %v60
    %v69 = vpack.c.b16 %v63, %v62
    %v70 = vpack.c.b16 %v65, %v64
    %v71 = vpack.c.b16 %v67, %v66
    %vm76 = vcmask 523264
    %v78 = vsel %vm76, %v43, 0
    %80 = vmatprep.subr.bf16.mxu0 0
    %81 = vmatpush1.bf16.msra.mxu0 0
    %82 = vmatprep.subr.bf16.mxu0 0
    %83 = vmatpush1.bf16.msra.mxu0 0
    %84 = vmatprep.subr.bf16.mxu0 0
    %85 = vmatpush1.bf16.msra.mxu0 0
    %86 = vmatprep.subr.bf16.mxu0 0
    %87 = vmatpush1.bf16.msra.mxu0 0
    %88 = vmatprep.subr.bf16.mxu0 0
    %89 = vmatpush1.bf16.msra.mxu0 %v71
    %90 = vmatprep.subr.bf16.mxu0 0
    %91 = vmatpush1.bf16.msra.mxu0 %v70
    %92 = vmatprep.subr.bf16.mxu0 0
    %93 = vmatpush1.bf16.msra.mxu0 %v69
    %94 = vmatprep.subr.bf16.mxu0 0
    %95 = vmatpush1.bf16.msra.mxu0 %v68
    %96 = vmatprep.subr.bf16.mxu0 0
    %97 = vmatpush2.bf16.msra.mxu0 0
    %98 = vmatprep.subr.bf16.mxu0 0
    %99 = vmatpush2.bf16.msra.mxu0 0
    %100 = vmatprep.subr.bf16.mxu0 0
    %101 = vmatpush2.bf16.msra.mxu0 0
    %102 = vmatprep.subr.bf16.mxu0 0
    %103 = vmatpush2.bf16.msra.mxu0 0
    %104 = vmatprep.subr.bf16.mxu0 0
    %105 = vmatpush2.bf16.msra.mxu0 0
    %106 = vmatprep.subr.bf16.mxu0 0
    %107 = vmatpush2.bf16.msra.mxu0 0
    %108 = vmatprep.subr.bf16.mxu0 0
    %109 = vmatpush2.bf16.msra.mxu0 0
    %110 = vmatprep.subr.bf16.mxu0 0
    %111 = vmatpush2.bf16.msra.mxu0 0
    %112 = vmatprep.mubr.bf16.mxu0 0
    %113 = vmatmul.mubr.bf16.gmra.mxu0 %v78
    %v114 = vpop.f32.mrf.mxu0
    %v115 = vadd.f32 0.0, %v114
    %v116 = vpop.f32.mrf.mxu0
    %v117 = vpop.f32.mrf.mxu0
    %v118 = vadd.f32 0.0, %v117
    %v119 = vpop.f32.mrf.mxu0
    %120 = vdwg.mxu0
    %v121 = vmul.f32 %v115, 11.313708
    %v122 = vmul.f32 %v118, 11.313708
    %v123 = vpack.c.bf16 %v122, %v121
    %v125 = vunpack.c.l.b16 %v123
    %v126 = vunpack.c.h.b16 %v123
    %v127 = vpack.c.b16 %v125, %v125
    %v128 = vpack.c.b16 %v126, %v126
    %131 = vst [vmem:[#allocation5] sm:$0xf] %v127
    %132 = vst [vmem:[#allocation5 + $0x4] sm:$0xf] %v128
    // Predicated region
    $region14: #{tpu_custom_call.1} parent=1 // pred_check
      _
    $region15: #{tpu_custom_call.1} parent=1 // pred_check_branch
      %134 = sbr.rel (0) target = $region17
    $region16: #{tpu_custom_call.1} parent=1 // pred_region
      %s136 = ssub.s32 128, 128
      %137 = vsyncadd [#allocation4], %s136
      %s138 = sshll.u32 [#allocation5], 4
      %s139 = int_to_ptr.vmem [resolvable:$true] %s138
      %144 = dma.vmem_to_hbm [thread:$0]  %s139, 128, %s2, [#allocation4], 64, 64, 4
    $region17: #{tpu_custom_call.1} parent=1 // pred_fallthru
      _
    // Predicated region
    $region18: #{tpu_custom_call.1} parent=1 // pred_check
      _
    $region19: #{tpu_custom_call.1} parent=1 // pred_check_branch
      %146 = sbr.rel (0) target = $region21
    $region20: #{tpu_custom_call.1} parent=1 // pred_region
      %147 = dma.done [#allocation4], 128
    $region21: #{tpu_custom_call.1} parent=1 // pred_fallthru
      _
    %148 = vsyncpa [#allocation3], 1
    %149 = vsyncpa [#allocation4], 1

</llo_original>
